<compile_context>
chip_gen: v6e
topology: v6e:2x2x1
jax: 0.10.0
libtpu: 0.0.40
codegen_flags: <defaults>
</compile_context>

<pallas_src>
import jax
import jax.numpy as jnp
from jax.experimental import pallas as pl
from jax.experimental.pallas import tpu as pltpu

_MiB = 1024 * 1024
_VMEM_BUDGET = 24 * _MiB        # conservative working-set target (fits v5e/v6e/v7x)
_RESIDENT_W_BYTES = 8 * _MiB    # single-copy bf16 weight threshold for resident path


def _round_up(a, m):
    return (a + m - 1) // m * m


def _pick_tm(m, fixed_bytes, per_row_bytes, cap=512):
    """Largest row-tile (multiple of 8, <= cap) that keeps the working set in budget."""
    m8 = _round_up(max(m, 1), 8)
    avail = max(_VMEM_BUDGET - fixed_bytes, per_row_bytes * 8)
    tm = max(8, min(cap, (avail // per_row_bytes) // 8 * 8))
    if tm >= m8:
        # Whole problem fits in one row block; split in two when possible so both
        # TensorCores get work on v7x (grid sharded via "parallel").
        if m8 >= 16 and m8 % 16 == 0:
            tm = m8 // 2
        else:
            tm = m8
    return tm


# ----------------------------------------------------------------------------
# Kernels
# ----------------------------------------------------------------------------
def _resident_kernel(x_ref, w_ref, o_ref):
    # x block is both the tanh-LHS and the residual (single x stream from HBM).
    xf = x_ref[...].astype(jnp.float32)
    t = jnp.tanh(xf).astype(w_ref.dtype)                     # f32 EUP (v5e-safe), bf16 MXU operand
    y = jnp.dot(t, w_ref[...], preferred_element_type=jnp.float32)
    o_ref[...] = (xf + y).astype(o_ref.dtype)


def _tiled_kernel(x_ref, w_ref, xres_ref, o_ref, t_ref):
    # tanh of the (tm, N) row block is computed once (j == 0) and cached as bf16;
    # the x LHS block is j-invariant so it is not re-DMA'd across j.
    @pl.when(pl.program_id(1) == 0)
    def _():
        t_ref[...] = jnp.tanh(x_ref[...].astype(jnp.float32)).astype(t_ref.dtype)

    y = jnp.dot(t_ref[...], w_ref[...], preferred_element_type=jnp.float32)
    o_ref[...] = (y + xres_ref[...].astype(jnp.float32)).astype(o_ref.dtype)


# ----------------------------------------------------------------------------
# Wrappers
# ----------------------------------------------------------------------------
def prepare_weight(w):
    """PyTorch Linear weight [out, in] -> MXU-ready [in, out] bf16. Do once at load."""
    n_out, n_in = w.shape
    assert n_out == n_in, "ResNetBlock expects a square [n, n] weight"
    return jnp.asarray(w).T.astype(jnp.bfloat16)


def _resident_call(x2, wt):
    m, n = x2.shape
    xi = x2.dtype.itemsize
    w_bytes = 2 * wt.size * wt.dtype.itemsize                 # worst case: double-buffered
    per_row = n * (2 * xi + 2 * xi + 3 * 4)                   # x dbuf + out dbuf + f32 temps
    tm = _pick_tm(m, w_bytes, per_row)
    ni = pl.cdiv(m, tm)
    vmem_limit = int(min(w_bytes + tm * per_row + 8 * _MiB, 48 * _MiB))

    cost = pl.CostEstimate(
        flops=2 * m * n * n,
        transcendentals=m * n,
        bytes_accessed=m * n * xi + wt.size * wt.dtype.itemsize + m * n * xi,
    )
    return pl.pallas_call(
        _resident_kernel,
        out_shape=jax.ShapeDtypeStruct((m, n), x2.dtype),
        grid_spec=pltpu.PrefetchScalarGridSpec(
            num_scalar_prefetch=0,
            grid=(ni,),
            in_specs=[
                pl.BlockSpec((tm, n), lambda i: (i, 0)),      # x: LHS + residual
                pl.BlockSpec((n, n), lambda i: (0, 0)),       # Wt: resident in VMEM
            ],
            out_specs=pl.BlockSpec((tm, n), lambda i: (i, 0)),
        ),
        compiler_params=pltpu.CompilerParams(
            dimension_semantics=("parallel",),
            vmem_limit_bytes=vmem_limit,
        ),
        cost_estimate=cost,
    )(x2, wt)


def _tiled_call(x2, wt):
    m, n = x2.shape
    xi = x2.dtype.itemsize
    # Output-column tile: prefer multiples of 256 (fills the 256-wide MXU on v6e/v7x),
    # shrink only if the double-buffered weight stream would blow the VMEM budget.
    tn = 512
    while tn > 128 and 2 * n * tn * 2 > 12 * _MiB:
        tn //= 2
    w_bytes = 2 * n * tn * 2
    per_row = n * (2 * xi + 2) + tn * (4 * xi + 8)            # x dbuf + tanh cache + res/out/temps
    tm = _pick_tm(m, w_bytes, per_row)
    ni, nj = pl.cdiv(m, tm), pl.cdiv(n, tn)
    vmem_limit = int(min(w_bytes + tm * per_row + 8 * _MiB, 48 * _MiB))

    cost = pl.CostEstimate(
        flops=2 * m * n * n,
        transcendentals=m * n,
        bytes_accessed=2 * m * n * xi + ni * n * n * 2 + m * n * xi,
    )
    return pl.pallas_call(
        _tiled_kernel,
        out_shape=jax.ShapeDtypeStruct((m, n), x2.dtype),
        grid_spec=pltpu.PrefetchScalarGridSpec(
            num_scalar_prefetch=0,
            grid=(ni, nj),
            in_specs=[
                pl.BlockSpec((tm, n), lambda i, j: (i, 0)),   # x LHS row block (j-invariant)
                pl.BlockSpec((n, tn), lambda i, j: (0, j)),   # Wt column block
                pl.BlockSpec((tm, tn), lambda i, j: (i, j)),  # x residual block
            ],
            out_specs=pl.BlockSpec((tm, tn), lambda i, j: (i, j)),
            scratch_shapes=[pltpu.VMEM((tm, n), jnp.bfloat16)],   # cached tanh(x)
        ),
        compiler_params=pltpu.CompilerParams(
            dimension_semantics=("parallel", "arbitrary"),
            vmem_limit_bytes=vmem_limit,
        ),
        cost_estimate=cost,
    )(x2, wt, x2)


def resnet_block_from_prepared(x, wt):
    """out = x + tanh(x) @ wt, with wt = W.T (bf16, [in, out]) prepared once."""
    n = wt.shape[0]
    assert wt.shape == (n, n) and x.shape[-1] == n
    orig_shape = x.shape
    x2 = x.reshape(-1, n)
    if wt.size * wt.dtype.itemsize <= _RESIDENT_W_BYTES:
        out = _resident_call(x2, wt)
    else:
        out = _tiled_call(x2, wt)
    return out.reshape(orig_shape)


@jax.jit
def resnet_block(x, w):
    """Convenience entry: w is the PyTorch Linear weight, shape [out, in]."""
    return resnet_block_from_prepared(x, prepare_weight(w))


if __name__ == "__main__":
    key = jax.random.PRNGKey(0)
    kx, kw, kx2 = jax.random.split(key, 3)

    n = 32                                                     # small shape (module default is 784)
    x = jax.random.normal(kx, (2, 8, n), dtype=jnp.float32)    # batched input
    bound = 1.0 / (n ** 0.5)                                   # PyTorch Linear default init scale
    w = jax.random.uniform(kw, (n, n), dtype=jnp.float32, minval=-bound, maxval=bound)

    wt = jax.block_until_ready(prepare_weight(w))              # weight prep hoisted out of the call
    run = jax.jit(resnet_block_from_prepared)

    out = jax.block_until_ready(run(x, wt))
    assert out.shape == x.shape, (out.shape, x.shape)

    # Tight check against a bf16-emulated reference (kernel's MXU operands are bf16).
    t_bf = jnp.tanh(x).astype(jnp.bfloat16).astype(jnp.float32)
    w_bf = w.T.astype(jnp.bfloat16).astype(jnp.float32)
    ref_bf = x + jnp.einsum("...k,kn->...n", t_bf, w_bf, preferred_element_type=jnp.float32)
    err_bf = float(jnp.max(jnp.abs(out - ref_bf)))
    assert err_bf < 1e-3, f"bf16-emulated max abs err too large: {err_bf}"

    # Loose check against the exact f32 reference.
    ref = x + jnp.tanh(x) @ w.T
    err = float(jnp.max(jnp.abs(out - ref)))
    assert err < 5e-2, f"f32 max abs err too large: {err}"

    # Ragged row count: exercises the partial (OOB-masked) last row block, no padding copies.
    x_odd = jax.random.normal(kx2, (3, n), dtype=jnp.float32)
    out_odd = jax.block_until_ready(run(x_odd, wt))
    ref_odd = x_odd + jnp.tanh(x_odd) @ w.T
    assert out_odd.shape == x_odd.shape
    assert float(jnp.max(jnp.abs(out_odd - ref_odd))) < 5e-2

    print("KERNEL_OK")
</pallas_src>

<mosaic_0001>
module attributes {stable_mosaic.version = 11 : i64} {
  func.func @_resident_kernel(%arg0: i32, %arg1: memref<8x32xf32, #tpu.memory_space<vmem>>, %arg2: memref<32x32xbf16, #tpu.memory_space<vmem>>, %arg3: memref<8x32xf32, #tpu.memory_space<vmem>>) attributes {dimension_semantics = [#tpu.dimension_semantics<parallel>], iteration_bounds = array<i64: 2>, scalar_prefetch = 0 : i64, scratch_operands = 0 : i64, tpu.core_type = #tpu.core_type<tc>, window_params = [{transform_indices = @transform_0, window_bounds = array<i64: 8, 32>}, {pipeline_mode = #tpu.pipeline_mode<synchronous>, transform_indices = @transform_1, window_bounds = array<i64: 32, 32>}, {transform_indices = @transform_2, window_bounds = array<i64: 8, 32>}]} {
    %c0 = arith.constant 0 : index
    %c0_0 = arith.constant 0 : index
    %0 = vector.load %arg1[%c0, %c0_0] : memref<8x32xf32, #tpu.memory_space<vmem>>, vector<8x32xf32>
    %1 = math.tanh %0 : vector<8x32xf32>
    %2 = arith.truncf %1 : vector<8x32xf32> to vector<8x32xbf16>
    %c0_1 = arith.constant 0 : index
    %c0_2 = arith.constant 0 : index
    %3 = vector.load %arg2[%c0_1, %c0_2] : memref<32x32xbf16, #tpu.memory_space<vmem>>, vector<32x32xbf16>
    %cst = arith.constant dense<0.000000e+00> : vector<8x32xf32>
    %4 = tpu.matmul %2, %3, %cst {dimension_numbers = #tpu.dot_dimension_numbers<[1], [0], [0], [1], [0, 0, 1, 1], [], []>} : vector<8x32xbf16>, vector<32x32xbf16>, vector<8x32xf32> -> vector<8x32xf32>
    %5 = arith.addf %0, %4 : vector<8x32xf32>
    %c0_3 = arith.constant 0 : index
    %c0_4 = arith.constant 0 : index
    %6 = vector.load %arg3[%c0_3, %c0_4] : memref<8x32xf32, #tpu.memory_space<vmem>>, vector<8x32xf32>
    tpu.vector_store %arg3[%c0_3, %c0_4], %5 {strides = array<i32>} : memref<8x32xf32, #tpu.memory_space<vmem>>, vector<8x32xf32>,
    return
  }
  func.func @transform_0(%arg0: i32) -> (i32, i32) {
    %c0_i32 = arith.constant 0 : i32
    %c0_i32_0 = arith.constant 0 : i32
    return %arg0, %c0_i32 : i32, i32
  }
  func.func @transform_1(%arg0: i32) -> (i32, i32) {
    %c0_i32 = arith.constant 0 : i32
    %c0_i32_0 = arith.constant 0 : i32
    %c0_i32_1 = arith.constant 0 : i32
    return %c0_i32, %c0_i32_0 : i32, i32
  }
  func.func @transform_2(%arg0: i32) -> (i32, i32) {
    %c0_i32 = arith.constant 0 : i32
    %c0_i32_0 = arith.constant 0 : i32
    return %arg0, %c0_i32 : i32, i32
  }
}

</mosaic_0001>

<llo_original>
// kernel: resnet_block_from_prepared.1
$region0: #{resnet_block_from_prepared.1}
  #allocation0 [shape = 'u32[]', space=smem, size = 0x4, offset = 0x4, fixed_abs, tag = 'smem constant byte address 0x4 - core index']
  #allocation1 [shape = 'u32[144,128]{1,0:T(1,128)}', space=vmem, size = 0x12000, scoped, tag = 'internal scratch']
  %s0 = inlined_call_operand.hbm [shape: f32[16,32], index: 0, kind: input, shape index: {}]
  %s1 = inlined_call_operand.hbm [shape: bf16[32,32], index: 1, kind: input, shape index: {}]
  %s2 = inlined_call_operand.hbm [shape: f32[16,32], index: 2, kind: output, shape index: {}]
  %s3 = sld [smem:[#allocation0]]
  $region49: #{resnet_block_from_prepared.1} parent=0
    _
  %s5 = ssub.s32 1, %s3
  %s6 = scalar_select 0, %s5, %s3
  $region1: #{resnet_block_from_prepared.1} parent=0
    #allocation2 [shape = 'u8[8192]{0}', space=vmem, size = 0x2000, scoped, tag = 'input window, operand 0']
    #allocation3 [shape = 's32[2]{0}', space=sflag, size = 0x8, scoped, tag = 'scoped memory for resnet_block_from_prepared.1']
    #allocation4 [shape = 's32[2]{0}', space=sflag, size = 0x8, scoped, tag = 'scoped memory for resnet_block_from_prepared.1']
    #allocation5 [shape = 'u8[8192]{0}', space=vmem, size = 0x2000, scoped, tag = 'input window, operand 1, single buffered']
    #allocation6 [shape = 's32[1]{0}', space=sflag, size = 0x4, scoped, tag = 'scoped memory for resnet_block_from_prepared.1']
    #allocation7 [shape = 'u8[8192]{0}', space=vmem, size = 0x2000, scoped, tag = 'output window, operand 0']
    %7 = vsyncpa [#allocation3], 0
    %s8 = scalar_lea.sflag [#allocation3], 1
    %9 = vsyncpa %s8, 0
    %10 = vsyncpa [#allocation6], 0
    %11 = vsyncpa [#allocation4], 0
    %s12 = scalar_lea.sflag [#allocation4], 1
    %13 = vsyncpa %s12, 0
    loop: start=0, step=1, limit=4
    $region2: #{resnet_block_from_prepared.1} parent=1 // loop_pre_header
      _
    $region3: #{resnet_block_from_prepared.1} parent=1 // loop_header
      %s15 = sphi 0, %s19
      %p16 = scmp.ge.s32.totalorder %s15, 4
      %s25 = sphi 0, %s27
      %s28 = sphi 0, %s25
      %s29 = sphi 0, %s28
      %s45 = sphi 0, %s29
      %s49 = sphi 0, %s49
      %s51 = sphi 0, %s49
      %s52 = sphi 0, %s51
      %s66 = sphi 0, %s52
      %s72 = sphi 0, %s74
      %s75 = sphi 0, %s72
      %s76 = sphi 0, %s75
      %s92 = sphi 0, %s76
    $region4: #{resnet_block_from_prepared.1} parent=1 // loop_header_branch
      %18 = sbr.rel (%p16) target = $region8
    $region5: #{resnet_block_from_prepared.1} parent=1 // loop_body
      %s20 = ssub.s32 %s15, 1
      %s21 = ssub.s32 %s15, 2
      %s22 = sadd.s32 %s15, 1
      %s23 = ssub.s32 %s15, %s22
      %p24 = scmp.eq.s32.totalorder %s23, 0
      %s26 = sadd.s32 %s25, 1
      %s27 = scalar_select %p24, %s25, %s26
      %p30 = pneg %p24
      %p31 = scmp.eq.s32.totalorder %s15, 1
      %p32 = por %p30, %p31
      %p33 = scmp.ne.s32.totalorder %s25, %s28
      %p34 = scmp.eq.s32.totalorder %s15, 0
      %p35 = por %p33, %p34
      %p36 = scmp.ne.s32.totalorder %s25, %s28
      %p37 = scmp.eq.s32.totalorder %s20, 1
      %p38 = por %p36, %p37
      %p39 = scmp.ne.s32.totalorder %s28, %s29
      %p40 = scmp.eq.s32.totalorder %s20, 0
      %p41 = por %p39, %p40
      %p42 = scmp.ne.s32.totalorder %s28, %s29
      %p43 = scmp.eq.s32.totalorder %s21, 1
      %p44 = por %p42, %p43
      %p46 = scmp.ne.s32.totalorder %s29, %s45
      %p47 = scmp.eq.s32.totalorder %s21, 0
      %p48 = por %p46, %p47
      %s50 = sadd.s32 %s49, 1
      %p53 = scmp.eq.s32.totalorder %s15, 1
      %p54 = scmp.ne.s32.totalorder %s49, %s51
      %p55 = scmp.eq.s32.totalorder %s15, 0
      %p56 = por %p54, %p55
      %p57 = scmp.ne.s32.totalorder %s49, %s51
      %p58 = scmp.eq.s32.totalorder %s20, 1
      %p59 = por %p57, %p58
      %p60 = scmp.ne.s32.totalorder %s51, %s52
      %p61 = scmp.eq.s32.totalorder %s20, 0
      %p62 = por %p60, %p61
      %p63 = scmp.ne.s32.totalorder %s51, %s52
      %p64 = scmp.eq.s32.totalorder %s21, 1
      %p65 = por %p63, %p64
      %p67 = scmp.ne.s32.totalorder %s52, %s66
      %p68 = scmp.eq.s32.totalorder %s21, 0
      %p69 = por %p67, %p68
      %s70 = ssub.s32 %s15, %s22
      %p71 = scmp.eq.s32.totalorder %s70, 0
      %s73 = sadd.s32 %s72, 1
      %s74 = scalar_select %p71, %s72, %s73
      %p77 = pneg %p71
      %p78 = scmp.eq.s32.totalorder %s15, 1
      %p79 = por %p77, %p78
      %p80 = scmp.ne.s32.totalorder %s72, %s75
      %p81 = scmp.eq.s32.totalorder %s15, 0
      %p82 = por %p80, %p81
      %p83 = scmp.ne.s32.totalorder %s72, %s75
      %p84 = scmp.eq.s32.totalorder %s20, 1
      %p85 = por %p83, %p84
      %p86 = scmp.ne.s32.totalorder %s75, %s76
      %p87 = scmp.eq.s32.totalorder %s20, 0
      %p88 = por %p86, %p87
      %p89 = scmp.ne.s32.totalorder %s75, %s76
      %p90 = scmp.eq.s32.totalorder %s21, 1
      %p91 = por %p89, %p90
      %p93 = scmp.ne.s32.totalorder %s76, %s92
      %p94 = scmp.eq.s32.totalorder %s21, 0
      %p95 = por %p93, %p94
      %p96 = scmp.le.s32.totalorder 1, %s15
      %p97 = scmp.lt.s32.totalorder %s15, 3
      %p98 = pnand %p96, %p97
      %p99 = pneg %p98
      // Predicated region
      $region9: #{resnet_block_from_prepared.1} parent=5 // pred_check
        _
      $region10: #{resnet_block_from_prepared.1} parent=5 // pred_check_branch
        %101 = sbr.rel (%p98) target = $region12
      $region11: #{resnet_block_from_prepared.1} parent=5 // pred_region
        %s102 = ssub.s32 %s15, 1
        // Predicated region
        $region13: #{resnet_block_from_prepared.1} parent=11 // pred_check
          %p103 = pneg %p62
        $region14: #{resnet_block_from_prepared.1} parent=11 // pred_check_branch
          %105 = sbr.rel (%p103) target = $region16
        $region15: #{resnet_block_from_prepared.1} parent=11 // pred_region
          %s107 = ssub.s32 256, 256
          %108 = vsyncadd [#allocation6], %s107
          %s109 = sshll.u32 [#allocation5], 4
          %s110 = int_to_ptr.vmem [resolvable:$true] %s109
          %115 = dma.hbm_to_vmem [thread:$0]  %s1, 256, %s110, [#allocation6], 64, 64, 4
        $region16: #{resnet_block_from_prepared.1} parent=11 // pred_fallthru
          _
      $region12: #{resnet_block_from_prepared.1} parent=5 // pred_fallthru
        _
      %p116 = scmp.lt.s32.totalorder %s15, 2
      // Predicated region
      $region17: #{resnet_block_from_prepared.1} parent=5 // pred_check
        %p117 = pneg %p116
      $region18: #{resnet_block_from_prepared.1} parent=5 // pred_check_branch
        %119 = sbr.rel (%p117) target = $region20
      $region19: #{resnet_block_from_prepared.1} parent=5 // pred_region
        // Predicated region
        $region21: #{resnet_block_from_prepared.1} parent=19 // pred_check
          %p120 = pneg %p35
        $region22: #{resnet_block_from_prepared.1} parent=19 // pred_check_branch
          %122 = sbr.rel (%p120) target = $region24
        $region23: #{resnet_block_from_prepared.1} parent=19 // pred_region
          %s123 = sand.u32 %s25, 1
          %s124 = scalar_lea.sflag [#allocation3], %s123
          %s125 = sand.u32 %s25, 1
          %s126 = smul.addr %s125, 8
          %s127 = scalar_lea.vmem [#allocation2], %s126
          %s129 = ssub.s32 128, 128
          %130 = vsyncadd %s124, %s129
          %s131 = smul.addr %s15, 128
          %s132 = scalar_lea.hbm %s0, %s131
          %s134 = sshll.u32 %s127, 4
          %s135 = int_to_ptr.vmem [resolvable:$true] %s134
          %137 = dma.hbm_to_vmem [thread:$0]  %s132, 128, %s135, %s124
        $region24: #{resnet_block_from_prepared.1} parent=19 // pred_fallthru
          _
      $region20: #{resnet_block_from_prepared.1} parent=5 // pred_fallthru
        _
      %p138 = scmp.le.s32.totalorder 1, %s15
      %p139 = scmp.lt.s32.totalorder %s15, 3
      %p140 = pnand %p138, %p139
      %p141 = pneg %p140
      // Predicated region
      $region25: #{resnet_block_from_prepared.1} parent=5 // pred_check
        _
      $region26: #{resnet_block_from_prepared.1} parent=5 // pred_check_branch
        %143 = sbr.rel (%p140) target = $region28
      $region27: #{resnet_block_from_prepared.1} parent=5 // pred_region
        %s144 = ssub.s32 %s15, 1
        %s145 = sand.u32 %s28, 1
        %s146 = scalar_lea.sflag [#allocation3], %s145
        %s147 = sand.u32 %s28, 1
        %s148 = smul.addr %s147, 8
        %s149 = scalar_lea.vmem [#allocation2], %s148
        // Predicated region
        $region29: #{resnet_block_from_prepared.1} parent=27 // pred_check
          %p150 = pneg %p41
        $region30: #{resnet_block_from_prepared.1} parent=27 // pred_check_branch
          %152 = sbr.rel (%p150) target = $region32
        $region31: #{resnet_block_from_prepared.1} parent=27 // pred_region
          %153 = dma.done %s146, 128
        $region32: #{resnet_block_from_prepared.1} parent=27 // pred_fallthru
          _
        // Predicated region
        $region33: #{resnet_block_from_prepared.1} parent=27 // pred_check
          %p154 = pneg %p62
        $region34: #{resnet_block_from_prepared.1} parent=27 // pred_check_branch
          %156 = sbr.rel (%p154) target = $region36
        $region35: #{resnet_block_from_prepared.1} parent=27 // pred_region
          %157 = dma.done [#allocation6], 256
        $region36: #{resnet_block_from_prepared.1} parent=27 // pred_fallthru
          _
        %s158 = sand.u32 %s28, 1
        %s159 = scalar_lea.sflag [#allocation3], %s158
        %s160 = sand.u32 %s28, 1
        %s161 = smul.addr %s160, 8
        %s162 = scalar_lea.vmem [#allocation2], %s161
        %p163 = pneg %p41
        %p164 = pneg %p38
        %p165 = pneg %p62
        %p166 = pneg %p59
        %p167 = pneg %p88
        %p168 = pneg %p85
        %s169 = sand.u32 %s75, 1
        %s170 = scalar_lea.sflag [#allocation4], %s169
        %s171 = sand.u32 %s75, 1
        %s172 = smul.addr %s171, 8
        %s173 = scalar_lea.vmem [#allocation7], %s172
        %v175 = vld [vmem:[%s149] sm:$0xff]
        %v176 = vtanh.pop %v175
        %v177 = vpack.c.bf16 %v176, %v176
        %v178 = vld [vmem:[#allocation5] sm:$0xf]
        %v179 = vld [vmem:[#allocation5 + $0x4] sm:$0xf]
        %v180 = vld [vmem:[#allocation5 + $0x8] sm:$0xf]
        %v181 = vld [vmem:[#allocation5 + $0xc] sm:$0xf]
        %v186 = vunpack.c.l.b16 %v178
        %v187 = vunpack.c.l.b16 %v179
        %v188 = vunpack.c.l.b16 %v180
        %v189 = vunpack.c.l.b16 %v181
        %v190 = vpack.c.b16 %v187, %v186
        %v191 = vpack.c.b16 %v189, %v188
        %vm194 = vcmask 261120
        %v196 = vsel %vm194, %v177, 0
        %198 = vmatprep.subr.bf16.mxu0 0
        %199 = vmatpush1.bf16.msra.mxu0 0
        %200 = vmatprep.subr.bf16.mxu0 0
        %201 = vmatpush1.bf16.msra.mxu0 0
        %202 = vmatprep.subr.bf16.mxu0 0
        %203 = vmatpush1.bf16.msra.mxu0 0
        %204 = vmatprep.subr.bf16.mxu0 0
        %205 = vmatpush1.bf16.msra.mxu0 0
        %206 = vmatprep.subr.bf16.mxu0 0
        %207 = vmatpush1.bf16.msra.mxu0 0
        %208 = vmatprep.subr.bf16.mxu0 0
        %209 = vmatpush1.bf16.msra.mxu0 0
        %210 = vmatprep.subr.bf16.mxu0 0
        %211 = vmatpush1.bf16.msra.mxu0 %v191
        %212 = vmatprep.subr.bf16.mxu0 0
        %213 = vmatpush1.bf16.msra.mxu0 %v190
        %214 = vmatprep.subr.bf16.mxu0 0
        %215 = vmatpush2.bf16.msra.mxu0 0
        %216 = vmatprep.subr.bf16.mxu0 0
        %217 = vmatpush2.bf16.msra.mxu0 0
        %218 = vmatprep.subr.bf16.mxu0 0
        %219 = vmatpush2.bf16.msra.mxu0 0
        %220 = vmatprep.subr.bf16.mxu0 0
        %221 = vmatpush2.bf16.msra.mxu0 0
        %222 = vmatprep.subr.bf16.mxu0 0
        %223 = vmatpush2.bf16.msra.mxu0 0
        %224 = vmatprep.subr.bf16.mxu0 0
        %225 = vmatpush2.bf16.msra.mxu0 0
        %226 = vmatprep.subr.bf16.mxu0 0
        %227 = vmatpush2.bf16.msra.mxu0 0
        %228 = vmatprep.subr.bf16.mxu0 0
        %229 = vmatpush2.bf16.msra.mxu0 0
        %230 = vmatprep.mubr.bf16.mxu0 0
        %231 = vmatmul.mubr.bf16.gmra.mxu0 %v196
        %v232 = vpop.f32.mrf.mxu0
        %v233 = vadd.f32 0.0, %v232
        %v234 = vpop.f32.mrf.mxu0
        %v235 = vpop.f32.mrf.mxu0
        %v236 = vpop.f32.mrf.mxu0
        %237 = vdwg.mxu0
        %v238 = vadd.f32 %v175, %v233
        %239 = vst.msk [vmem:[%s173] sm:$0xff] %vm194, %v238
        %s240 = sand.u32 %s75, 1
        %s241 = scalar_lea.sflag [#allocation4], %s240
        %s242 = sand.u32 %s75, 1
        %s243 = smul.addr %s242, 8
        %s244 = scalar_lea.vmem [#allocation7], %s243
        // Predicated region
        $region37: #{resnet_block_from_prepared.1} parent=27 // pred_check
          %p245 = pneg %p85
        $region38: #{resnet_block_from_prepared.1} parent=27 // pred_check_branch
          %247 = sbr.rel (%p245) target = $region40
        $region39: #{resnet_block_from_prepared.1} parent=27 // pred_region
          %s249 = ssub.s32 128, 128
          %250 = vsyncadd %s241, %s249
          %s251 = smul.addr %s20, 128
          %s252 = scalar_lea.hbm %s2, %s251
          %s254 = sshll.u32 %s244, 4
          %s255 = int_to_ptr.vmem [resolvable:$true] %s254
          %257 = dma.vmem_to_hbm [thread:$0]  %s255, 128, %s252, %s241
        $region40: #{resnet_block_from_prepared.1} parent=27 // pred_fallthru
          _
      $region28: #{resnet_block_from_prepared.1} parent=5 // pred_fallthru
        _
      %p258 = scmp.le.s32.totalorder 2, %s15
      // Predicated region
      $region41: #{resnet_block_from_prepared.1} parent=5 // pred_check
        %p259 = pneg %p258
      $region42: #{resnet_block_from_prepared.1} parent=5 // pred_check_branch
        %261 = sbr.rel (%p259) target = $region44
      $region43: #{resnet_block_from_prepared.1} parent=5 // pred_region
        %s262 = ssub.s32 %s15, 2
        // Predicated region
        $region45: #{resnet_block_from_prepared.1} parent=43 // pred_check
          %p263 = pneg %p91
        $region46: #{resnet_block_from_prepared.1} parent=43 // pred_check_branch
          %265 = sbr.rel (%p263) target = $region48
        $region47: #{resnet_block_from_prepared.1} parent=43 // pred_region
          %s266 = sand.u32 %s76, 1
          %s267 = scalar_lea.sflag [#allocation4], %s266
          %s268 = sand.u32 %s76, 1
          %s269 = smul.addr %s268, 8
          %s270 = scalar_lea.vmem [#allocation7], %s269
          %271 = dma.done %s267, 128
        $region48: #{resnet_block_from_prepared.1} parent=43 // pred_fallthru
          _
      $region44: #{resnet_block_from_prepared.1} parent=5 // pred_fallthru
        _
    $region6: #{resnet_block_from_prepared.1} parent=1 // loop_footer
      %s19 = sadd.s32 1, %s15
    $region7: #{resnet_block_from_prepared.1} parent=1 // loop_footer_branch
      %14 = sbr.rel target = $region3
    $region8: #{resnet_block_from_prepared.1} parent=1 // loop_exit
      _
    %272 = vsyncpa [#allocation3], 1
    %s273 = scalar_lea.sflag [#allocation3], 1
    %274 = vsyncpa %s273, 1
    %275 = vsyncpa [#allocation6], 1
    %276 = vsyncpa [#allocation4], 1
    %s277 = scalar_lea.sflag [#allocation4], 1
    %278 = vsyncpa %s277, 1

</llo_original>
